<compile_context>
chip_gen: v5e
topology: v5e:2x2
jax: 0.10.0
libtpu: 0.0.40
codegen_flags: <defaults>
</compile_context>

<pallas_src>
import jax
import jax.numpy as jnp
from jax.experimental import pallas as pl
from jax.experimental.pallas import tpu as pltpu

_LANE = 128


# ----------------------------------------------------------------------------
# Pallas kernel: complex contraction over input channels, lane axis = modes.
#   out[b,o,p] = sum_i x[b,i,p] * w[i,o,p]   (complex, r/i packed on sublanes)
# ----------------------------------------------------------------------------
def _make_spectral_kernel(cin, cout):
    def kernel(x_ref, w_ref, o_ref):
        # x_ref: (B, 2*Cin, TP)  [channels 0:Cin real, Cin:2Cin imag]
        # w_ref: (Cin, 2*Cout, TP) [0:Cout real, Cout:2Cout imag]
        # o_ref: (B, 2*Cout, TP)
        x = x_ref[...]
        w = w_ref[...]
        b = x.shape[0]
        tp = x.shape[-1]
        acc_r = jnp.zeros((b, cout, tp), jnp.float32)
        acc_i = jnp.zeros((b, cout, tp), jnp.float32)
        # Accumulating unrolled loop over input channels (Cin is small, known
        # at trace time).  Live set stays at output-tile size; the rank-4
        # (B, Cin, Cout, TP) broadcast of the old version never materializes.
        for i in range(cin):
            xr = x[:, i, None, :]          # (B, 1, TP)
            xi = x[:, cin + i, None, :]
            wr = w[i, None, :cout, :]      # (1, Cout, TP)
            wi = w[i, None, cout:, :]
            acc_r = acc_r + xr * wr - xi * wi
            acc_i = acc_i + xr * wi + xi * wr
        # Single lane/sublane-dense store of the packed (real | imag) output.
        o_ref[...] = jnp.concatenate([acc_r, acc_i], axis=1)

    return kernel


def _vmem_capacity_bytes():
    try:
        cap = getattr(pltpu.get_tpu_info(), "vmem_capacity_bytes", None)
        if cap:
            return int(cap)
    except Exception:
        pass
    return 64 * 1024 * 1024  # conservative fallback (v7x per-TC figure)


def _pick_mode_tile(B, Ci, Co, P_total):
    """Lane tile over the flattened (band-folded) mode axis, generation-aware."""
    vmem_cap = _vmem_capacity_bytes()
    # Scoped VMEM limit: ~48 MiB on 64 MiB v7x, 96 MiB on 128 MiB v5e/v6e.
    vmem_limit = int(min(vmem_cap * 3 // 4, 96 * 1024 * 1024))
    budget = int(vmem_cap * 2 // 5)
    # f32 bytes per lane: double-buffered I/O tiles + in-kernel accs/temps.
    io_per_lane = 4 * 2 * (B * 2 * Ci + Ci * 2 * Co + B * 2 * Co)
    scratch_per_lane = 4 * (4 * B * Co + B + 2 * Co)
    per_lane = io_per_lane + scratch_per_lane

    p128 = pl.cdiv(P_total, _LANE) * _LANE
    tp = (budget // per_lane) // _LANE * _LANE
    tp = max(_LANE, min(tp, p128))
    # Keep >= 2 "parallel" grid steps when it helps: always on 64 MiB (v7x,
    # 2 TCs -> megacore sharding), and on large problems everywhere (each
    # tile then still >= 512 lanes, near the HBM roofline).
    want_split = (p128 >= 2 * _LANE) and (vmem_cap <= 64 * 1024 * 1024 or p128 >= 8 * _LANE)
    if want_split and tp > p128 // 2:
        tp = max(_LANE, (p128 // 2) // _LANE * _LANE)
    p_pad = pl.cdiv(p128, tp) * tp
    return tp, p_pad, vmem_limit


def spectral_mode_mul(x_pack, w_pack, cin, cout, tp, vmem_limit):
    """x_pack: (B, 2*Cin, Pp) f32; w_pack: (Cin, 2*Cout, Pp) f32 -> (B, 2*Cout, Pp) f32."""
    B, _, Pp = x_pack.shape
    n_p = Pp // tp
    return pl.pallas_call(
        _make_spectral_kernel(cin, cout),
        out_shape=jax.ShapeDtypeStruct((B, 2 * cout, Pp), jnp.float32),
        grid_spec=pltpu.PrefetchScalarGridSpec(
            num_scalar_prefetch=0,
            grid=(n_p,),  # lane tiles over the band-folded mode axis
            in_specs=[
                pl.BlockSpec((B, 2 * cin, tp), lambda p: (0, 0, p)),
                pl.BlockSpec((cin, 2 * cout, tp), lambda p: (0, 0, p)),
            ],
            out_specs=pl.BlockSpec((B, 2 * cout, tp), lambda p: (0, 0, p)),
        ),
        compiler_params=pltpu.CompilerParams(
            dimension_semantics=("parallel",),
            vmem_limit_bytes=vmem_limit,
        ),
    )(x_pack, w_pack)


# ----------------------------------------------------------------------------
# SpectralConv2d forward (FFT glue in JAX, mode contraction in Pallas)
# ----------------------------------------------------------------------------
def spectral_conv2d(x, w1, w2, modes1, modes2):
    """x: (B, Cin, H, W) f32; w1, w2: (Cin, Cout, m1, m2) complex64 -> (B, Cout, H, W)."""
    B, Cin, H, W = x.shape
    Cout = w1.shape[1]
    m1, m2 = modes1, modes2
    Wf = W // 2 + 1
    P = m1 * m2

    # Degenerate-size guard (silent truncation would diverge from the reference).
    assert m1 <= H and m2 <= Wf, "modes1/modes2 exceed the retained spectrum size"

    # TODO(synk): FFT has no Pallas equivalent; rfft2 / irfft2 stay in plain JAX.
    x_ft = jnp.fft.rfft2(x, axes=(-2, -1))                        # (B, Cin, H, Wf) c64

    # Low/high retained bands, modes flattened on the minor (lane) axis; the
    # two weight sets are folded into one pass by concatenating along lanes.
    x_lo = x_ft[:, :, :m1, :m2].reshape(B, Cin, P)
    x_hi = x_ft[:, :, H - m1:, :m2].reshape(B, Cin, P)
    x_bands = jnp.concatenate([x_lo, x_hi], axis=-1)              # (B, Cin, 2P) c64
    w_bands = jnp.concatenate([w1.reshape(Cin, Cout, P),
                               w2.reshape(Cin, Cout, P)], axis=-1)  # (Cin, Cout, 2P) c64

    # Pack real/imag along the channel (sublane) axis -> full 8-sublane tiles.
    x_pack = jnp.concatenate([jnp.real(x_bands), jnp.imag(x_bands)],
                             axis=1).astype(jnp.float32)         # (B, 2Cin, 2P)
    w_pack = jnp.concatenate([jnp.real(w_bands), jnp.imag(w_bands)],
                             axis=1).astype(jnp.float32)         # (Cin, 2Cout, 2P)

    tp, p_pad, vmem_limit = _pick_mode_tile(B, Cin, Cout, 2 * P)
    if p_pad != 2 * P:  # zero-pad lanes (padding lanes contribute zero, sliced off)
        x_pack = jnp.pad(x_pack, ((0, 0), (0, 0), (0, p_pad - 2 * P)))
        w_pack = jnp.pad(w_pack, ((0, 0), (0, 0), (0, p_pad - 2 * P)))

    out_pack = spectral_mode_mul(x_pack, w_pack, Cin, Cout, tp, vmem_limit)

    # Spectrum assembly on f32 real/imag planes; complex64 formed exactly once.
    out_r = out_pack[:, :Cout, :2 * P]
    out_i = out_pack[:, Cout:, :2 * P]
    lo_r = out_r[:, :, :P].reshape(B, Cout, m1, m2)
    hi_r = out_r[:, :, P:].reshape(B, Cout, m1, m2)
    lo_i = out_i[:, :, :P].reshape(B, Cout, m1, m2)
    hi_i = out_i[:, :, P:].reshape(B, Cout, m1, m2)

    if H >= 2 * m1:
        zmid = jnp.zeros((B, Cout, H - 2 * m1, m2), jnp.float32)
        pad_w = ((0, 0), (0, 0), (0, 0), (0, Wf - m2))
        ft_r = jnp.pad(jnp.concatenate([lo_r, zmid, hi_r], axis=2), pad_w)
        ft_i = jnp.pad(jnp.concatenate([lo_i, zmid, hi_i], axis=2), pad_w)
    else:  # overlapping bands: keep reference semantics (later write wins)
        ft_r = jnp.zeros((B, Cout, H, Wf), jnp.float32)
        ft_i = jnp.zeros((B, Cout, H, Wf), jnp.float32)
        ft_r = ft_r.at[:, :, :m1, :m2].set(lo_r).at[:, :, H - m1:, :m2].set(hi_r)
        ft_i = ft_i.at[:, :, :m1, :m2].set(lo_i).at[:, :, H - m1:, :m2].set(hi_i)

    out_ft = (ft_r + 1j * ft_i).astype(jnp.complex64)
    return jnp.fft.irfft2(out_ft, s=(H, W), axes=(-2, -1))


# Pure-JAX reference (mirrors the PyTorch module) for correctness check.
def spectral_conv2d_ref(x, w1, w2, modes1, modes2):
    B, Cin, H, W = x.shape
    Cout = w1.shape[1]
    Wf = W // 2 + 1
    x_ft = jnp.fft.rfft2(x, axes=(-2, -1))
    out_ft = jnp.zeros((B, Cout, H, Wf), dtype=jnp.complex64)
    lo = jnp.einsum("bixy,ioxy->boxy", x_ft[:, :, :modes1, :modes2], w1)
    hi = jnp.einsum("bixy,ioxy->boxy", x_ft[:, :, -modes1:, :modes2], w2)
    out_ft = out_ft.at[:, :, :modes1, :modes2].set(lo)
    out_ft = out_ft.at[:, :, -modes1:, :modes2].set(hi)
    return jnp.fft.irfft2(out_ft, s=(H, W), axes=(-2, -1))


if __name__ == "__main__":
    B, Cin, Cout, H, W = 2, 4, 4, 16, 16
    modes1, modes2 = 6, 6

    key = jax.random.PRNGKey(0)
    kx, kw1r, kw1i, kw2r, kw2i = jax.random.split(key, 5)

    x = jax.random.normal(kx, (B, Cin, H, W), dtype=jnp.float32)

    scale = 1.0 / (Cin * Cout)
    w1 = scale * (jax.random.normal(kw1r, (Cin, Cout, modes1, modes2))
                  + 1j * jax.random.normal(kw1i, (Cin, Cout, modes1, modes2))).astype(jnp.complex64)
    w2 = scale * (jax.random.normal(kw2r, (Cin, Cout, modes1, modes2))
                  + 1j * jax.random.normal(kw2i, (Cin, Cout, modes1, modes2))).astype(jnp.complex64)

    fwd = jax.jit(spectral_conv2d, static_argnums=(3, 4))
    out = jax.block_until_ready(fwd(x, w1, w2, modes1, modes2))

    ref = jax.block_until_ready(spectral_conv2d_ref(x, w1, w2, modes1, modes2))
    assert out.shape == (B, Cout, H, W), out.shape
    assert jnp.allclose(out, ref, atol=1e-4, rtol=1e-4), float(jnp.max(jnp.abs(out - ref)))

    print("KERNEL_OK")
</pallas_src>

<mosaic_0001>
module attributes {stable_mosaic.version = 11 : i64} {
  func.func @kernel(%arg0: i32, %arg1: memref<2x8x128xf32, #tpu.memory_space<vmem>>, %arg2: memref<4x8x128xf32, #tpu.memory_space<vmem>>, %arg3: memref<2x8x128xf32, #tpu.memory_space<vmem>>) attributes {dimension_semantics = [#tpu.dimension_semantics<parallel>], iteration_bounds = array<i64: 1>, scalar_prefetch = 0 : i64, scratch_operands = 0 : i64, tpu.core_type = #tpu.core_type<tc>, window_params = [{transform_indices = @transform_0, window_bounds = array<i64: 2, 8, 128>}, {transform_indices = @transform_1, window_bounds = array<i64: 4, 8, 128>}, {transform_indices = @transform_2, window_bounds = array<i64: 2, 8, 128>}]} {
    %c0 = arith.constant 0 : index
    %c0_0 = arith.constant 0 : index
    %c0_1 = arith.constant 0 : index
    %0 = vector.load %arg1[%c0, %c0_0, %c0_1] : memref<2x8x128xf32, #tpu.memory_space<vmem>>, vector<2x8x128xf32>
    %c0_2 = arith.constant 0 : index
    %c0_3 = arith.constant 0 : index
    %c0_4 = arith.constant 0 : index
    %1 = vector.load %arg2[%c0_2, %c0_3, %c0_4] : memref<4x8x128xf32, #tpu.memory_space<vmem>>, vector<4x8x128xf32>
    %cst = arith.constant 0.000000e+00 : f32
    %2 = vector.broadcast %cst : f32 to vector<2x4x128xf32>
    %cst_5 = arith.constant 0.000000e+00 : f32
    %3 = vector.broadcast %cst_5 : f32 to vector<2x4x128xf32>
    %4 = vector.extract_strided_slice %0 {offsets = [0, 0, 0], sizes = [2, 1, 128], strides = [1, 1, 1]} : vector<2x8x128xf32> to vector<2x1x128xf32>
    %5 = vector.shape_cast %4 : vector<2x1x128xf32> to vector<2x128xf32>
    %6 = vector.shape_cast %5 : vector<2x128xf32> to vector<2x1x128xf32>
    %7 = vector.extract_strided_slice %0 {offsets = [0, 4, 0], sizes = [2, 1, 128], strides = [1, 1, 1]} : vector<2x8x128xf32> to vector<2x1x128xf32>
    %8 = vector.shape_cast %7 : vector<2x1x128xf32> to vector<2x128xf32>
    %9 = vector.shape_cast %8 : vector<2x128xf32> to vector<2x1x128xf32>
    %10 = vector.extract_strided_slice %1 {offsets = [0, 0, 0], sizes = [1, 4, 128], strides = [1, 1, 1]} : vector<4x8x128xf32> to vector<1x4x128xf32>
    %11 = vector.shape_cast %10 : vector<1x4x128xf32> to vector<4x128xf32>
    %12 = vector.shape_cast %11 : vector<4x128xf32> to vector<1x4x128xf32>
    %13 = vector.extract_strided_slice %1 {offsets = [0, 4, 0], sizes = [1, 4, 128], strides = [1, 1, 1]} : vector<4x8x128xf32> to vector<1x4x128xf32>
    %14 = vector.shape_cast %13 : vector<1x4x128xf32> to vector<4x128xf32>
    %15 = vector.shape_cast %14 : vector<4x128xf32> to vector<1x4x128xf32>
    %16 = vector.broadcast %6 : vector<2x1x128xf32> to vector<2x4x128xf32>
    %17 = vector.broadcast %12 : vector<1x4x128xf32> to vector<2x4x128xf32>
    %18 = arith.mulf %16, %17 : vector<2x4x128xf32>
    %19 = arith.addf %2, %18 : vector<2x4x128xf32>
    %20 = vector.broadcast %9 : vector<2x1x128xf32> to vector<2x4x128xf32>
    %21 = vector.broadcast %15 : vector<1x4x128xf32> to vector<2x4x128xf32>
    %22 = arith.mulf %20, %21 : vector<2x4x128xf32>
    %23 = arith.subf %19, %22 : vector<2x4x128xf32>
    %24 = vector.broadcast %6 : vector<2x1x128xf32> to vector<2x4x128xf32>
    %25 = vector.broadcast %15 : vector<1x4x128xf32> to vector<2x4x128xf32>
    %26 = arith.mulf %24, %25 : vector<2x4x128xf32>
    %27 = arith.addf %3, %26 : vector<2x4x128xf32>
    %28 = vector.broadcast %9 : vector<2x1x128xf32> to vector<2x4x128xf32>
    %29 = vector.broadcast %12 : vector<1x4x128xf32> to vector<2x4x128xf32>
    %30 = arith.mulf %28, %29 : vector<2x4x128xf32>
    %31 = arith.addf %27, %30 : vector<2x4x128xf32>
    %32 = vector.extract_strided_slice %0 {offsets = [0, 1, 0], sizes = [2, 1, 128], strides = [1, 1, 1]} : vector<2x8x128xf32> to vector<2x1x128xf32>
    %33 = vector.shape_cast %32 : vector<2x1x128xf32> to vector<2x128xf32>
    %34 = vector.shape_cast %33 : vector<2x128xf32> to vector<2x1x128xf32>
    %35 = vector.extract_strided_slice %0 {offsets = [0, 5, 0], sizes = [2, 1, 128], strides = [1, 1, 1]} : vector<2x8x128xf32> to vector<2x1x128xf32>
    %36 = vector.shape_cast %35 : vector<2x1x128xf32> to vector<2x128xf32>
    %37 = vector.shape_cast %36 : vector<2x128xf32> to vector<2x1x128xf32>
    %38 = vector.extract_strided_slice %1 {offsets = [1, 0, 0], sizes = [1, 4, 128], strides = [1, 1, 1]} : vector<4x8x128xf32> to vector<1x4x128xf32>
    %39 = vector.shape_cast %38 : vector<1x4x128xf32> to vector<4x128xf32>
    %40 = vector.shape_cast %39 : vector<4x128xf32> to vector<1x4x128xf32>
    %41 = vector.extract_strided_slice %1 {offsets = [1, 4, 0], sizes = [1, 4, 128], strides = [1, 1, 1]} : vector<4x8x128xf32> to vector<1x4x128xf32>
    %42 = vector.shape_cast %41 : vector<1x4x128xf32> to vector<4x128xf32>
    %43 = vector.shape_cast %42 : vector<4x128xf32> to vector<1x4x128xf32>
    %44 = vector.broadcast %34 : vector<2x1x128xf32> to vector<2x4x128xf32>
    %45 = vector.broadcast %40 : vector<1x4x128xf32> to vector<2x4x128xf32>
    %46 = arith.mulf %44, %45 : vector<2x4x128xf32>
    %47 = arith.addf %23, %46 : vector<2x4x128xf32>
    %48 = vector.broadcast %37 : vector<2x1x128xf32> to vector<2x4x128xf32>
    %49 = vector.broadcast %43 : vector<1x4x128xf32> to vector<2x4x128xf32>
    %50 = arith.mulf %48, %49 : vector<2x4x128xf32>
    %51 = arith.subf %47, %50 : vector<2x4x128xf32>
    %52 = vector.broadcast %34 : vector<2x1x128xf32> to vector<2x4x128xf32>
    %53 = vector.broadcast %43 : vector<1x4x128xf32> to vector<2x4x128xf32>
    %54 = arith.mulf %52, %53 : vector<2x4x128xf32>
    %55 = arith.addf %31, %54 : vector<2x4x128xf32>
    %56 = vector.broadcast %37 : vector<2x1x128xf32> to vector<2x4x128xf32>
    %57 = vector.broadcast %40 : vector<1x4x128xf32> to vector<2x4x128xf32>
    %58 = arith.mulf %56, %57 : vector<2x4x128xf32>
    %59 = arith.addf %55, %58 : vector<2x4x128xf32>
    %60 = vector.extract_strided_slice %0 {offsets = [0, 2, 0], sizes = [2, 1, 128], strides = [1, 1, 1]} : vector<2x8x128xf32> to vector<2x1x128xf32>
    %61 = vector.shape_cast %60 : vector<2x1x128xf32> to vector<2x128xf32>
    %62 = vector.shape_cast %61 : vector<2x128xf32> to vector<2x1x128xf32>
    %63 = vector.extract_strided_slice %0 {offsets = [0, 6, 0], sizes = [2, 1, 128], strides = [1, 1, 1]} : vector<2x8x128xf32> to vector<2x1x128xf32>
    %64 = vector.shape_cast %63 : vector<2x1x128xf32> to vector<2x128xf32>
    %65 = vector.shape_cast %64 : vector<2x128xf32> to vector<2x1x128xf32>
    %66 = vector.extract_strided_slice %1 {offsets = [2, 0, 0], sizes = [1, 4, 128], strides = [1, 1, 1]} : vector<4x8x128xf32> to vector<1x4x128xf32>
    %67 = vector.shape_cast %66 : vector<1x4x128xf32> to vector<4x128xf32>
    %68 = vector.shape_cast %67 : vector<4x128xf32> to vector<1x4x128xf32>
    %69 = vector.extract_strided_slice %1 {offsets = [2, 4, 0], sizes = [1, 4, 128], strides = [1, 1, 1]} : vector<4x8x128xf32> to vector<1x4x128xf32>
    %70 = vector.shape_cast %69 : vector<1x4x128xf32> to vector<4x128xf32>
    %71 = vector.shape_cast %70 : vector<4x128xf32> to vector<1x4x128xf32>
    %72 = vector.broadcast %62 : vector<2x1x128xf32> to vector<2x4x128xf32>
    %73 = vector.broadcast %68 : vector<1x4x128xf32> to vector<2x4x128xf32>
    %74 = arith.mulf %72, %73 : vector<2x4x128xf32>
    %75 = arith.addf %51, %74 : vector<2x4x128xf32>
    %76 = vector.broadcast %65 : vector<2x1x128xf32> to vector<2x4x128xf32>
    %77 = vector.broadcast %71 : vector<1x4x128xf32> to vector<2x4x128xf32>
    %78 = arith.mulf %76, %77 : vector<2x4x128xf32>
    %79 = arith.subf %75, %78 : vector<2x4x128xf32>
    %80 = vector.broadcast %62 : vector<2x1x128xf32> to vector<2x4x128xf32>
    %81 = vector.broadcast %71 : vector<1x4x128xf32> to vector<2x4x128xf32>
    %82 = arith.mulf %80, %81 : vector<2x4x128xf32>
    %83 = arith.addf %59, %82 : vector<2x4x128xf32>
    %84 = vector.broadcast %65 : vector<2x1x128xf32> to vector<2x4x128xf32>
    %85 = vector.broadcast %68 : vector<1x4x128xf32> to vector<2x4x128xf32>
    %86 = arith.mulf %84, %85 : vector<2x4x128xf32>
    %87 = arith.addf %83, %86 : vector<2x4x128xf32>
    %88 = vector.extract_strided_slice %0 {offsets = [0, 3, 0], sizes = [2, 1, 128], strides = [1, 1, 1]} : vector<2x8x128xf32> to vector<2x1x128xf32>
    %89 = vector.shape_cast %88 : vector<2x1x128xf32> to vector<2x128xf32>
    %90 = vector.shape_cast %89 : vector<2x128xf32> to vector<2x1x128xf32>
    %91 = vector.extract_strided_slice %0 {offsets = [0, 7, 0], sizes = [2, 1, 128], strides = [1, 1, 1]} : vector<2x8x128xf32> to vector<2x1x128xf32>
    %92 = vector.shape_cast %91 : vector<2x1x128xf32> to vector<2x128xf32>
    %93 = vector.shape_cast %92 : vector<2x128xf32> to vector<2x1x128xf32>
    %94 = vector.extract_strided_slice %1 {offsets = [3, 0, 0], sizes = [1, 4, 128], strides = [1, 1, 1]} : vector<4x8x128xf32> to vector<1x4x128xf32>
    %95 = vector.shape_cast %94 : vector<1x4x128xf32> to vector<4x128xf32>
    %96 = vector.shape_cast %95 : vector<4x128xf32> to vector<1x4x128xf32>
    %97 = vector.extract_strided_slice %1 {offsets = [3, 4, 0], sizes = [1, 4, 128], strides = [1, 1, 1]} : vector<4x8x128xf32> to vector<1x4x128xf32>
    %98 = vector.shape_cast %97 : vector<1x4x128xf32> to vector<4x128xf32>
    %99 = vector.shape_cast %98 : vector<4x128xf32> to vector<1x4x128xf32>
    %100 = vector.broadcast %90 : vector<2x1x128xf32> to vector<2x4x128xf32>
    %101 = vector.broadcast %96 : vector<1x4x128xf32> to vector<2x4x128xf32>
    %102 = arith.mulf %100, %101 : vector<2x4x128xf32>
    %103 = arith.addf %79, %102 : vector<2x4x128xf32>
    %104 = vector.broadcast %93 : vector<2x1x128xf32> to vector<2x4x128xf32>
    %105 = vector.broadcast %99 : vector<1x4x128xf32> to vector<2x4x128xf32>
    %106 = arith.mulf %104, %105 : vector<2x4x128xf32>
    %107 = arith.subf %103, %106 : vector<2x4x128xf32>
    %108 = vector.broadcast %90 : vector<2x1x128xf32> to vector<2x4x128xf32>
    %109 = vector.broadcast %99 : vector<1x4x128xf32> to vector<2x4x128xf32>
    %110 = arith.mulf %108, %109 : vector<2x4x128xf32>
    %111 = arith.addf %87, %110 : vector<2x4x128xf32>
    %112 = vector.broadcast %93 : vector<2x1x128xf32> to vector<2x4x128xf32>
    %113 = vector.broadcast %96 : vector<1x4x128xf32> to vector<2x4x128xf32>
    %114 = arith.mulf %112, %113 : vector<2x4x128xf32>
    %115 = arith.addf %111, %114 : vector<2x4x128xf32>
    %116 = tpu.concatenate %107, %115 in 1 : vector<2x4x128xf32>, vector<2x4x128xf32> -> vector<2x8x128xf32>
    %c0_6 = arith.constant 0 : index
    %c0_7 = arith.constant 0 : index
    %c0_8 = arith.constant 0 : index
    %117 = vector.load %arg3[%c0_6, %c0_7, %c0_8] : memref<2x8x128xf32, #tpu.memory_space<vmem>>, vector<2x8x128xf32>
    tpu.vector_store %arg3[%c0_6, %c0_7, %c0_8], %116 {strides = array<i32>} : memref<2x8x128xf32, #tpu.memory_space<vmem>>, vector<2x8x128xf32>,
    return
  }
  func.func @transform_0(%arg0: i32) -> (i32, i32, i32) {
    %c0_i32 = arith.constant 0 : i32
    %c0_i32_0 = arith.constant 0 : i32
    %c0_i32_1 = arith.constant 0 : i32
    return %c0_i32, %c0_i32_0, %arg0 : i32, i32, i32
  }
  func.func @transform_1(%arg0: i32) -> (i32, i32, i32) {
    %c0_i32 = arith.constant 0 : i32
    %c0_i32_0 = arith.constant 0 : i32
    %c0_i32_1 = arith.constant 0 : i32
    return %c0_i32, %c0_i32_0, %arg0 : i32, i32, i32
  }
  func.func @transform_2(%arg0: i32) -> (i32, i32, i32) {
    %c0_i32 = arith.constant 0 : i32
    %c0_i32_0 = arith.constant 0 : i32
    %c0_i32_1 = arith.constant 0 : i32
    return %c0_i32, %c0_i32_0, %arg0 : i32, i32, i32
  }
}

</mosaic_0001>

<llo_original>
// kernel: custom-call
$region0: #{custom-call}
  %s0 = inlined_call_operand.hbm [shape: c64[4,4,6,6], index: 0, kind: input, shape index: {}]
  %s1 = inlined_call_operand.vmem [shape: f32[4,4,6,6], index: 1, kind: output, shape index: {}]
  $region1: #{custom-call} parent=0
    #allocation0 [shape = 's32[1]{0}', space=sflag, size = 0x4, scoped, tag = 'scoped memory for custom-call']
    %2 = vsyncpa [#allocation0], 0
    %s4 = sshll.u32 %s0, 4
    %s5 = int_to_ptr.hbm [resolvable:$true] %s4
    %s6 = sshll.u32 %s1, 4
    %s7 = int_to_ptr.vmem [resolvable:$true] %s6
    %9 = dma.hbm_to_vmem [thread:$0]  %s5, 1536, %s7, [#allocation0]
    %11 = dma.done [#allocation0], 1536
    %12 = vsyncpa [#allocation0], 1

// kernel: custom-call.1
$region0: #{custom-call.1}
  %s0 = inlined_call_operand.hbm [shape: c64[4,4,6,6], index: 0, kind: input, shape index: {}]
  %s1 = inlined_call_operand.vmem [shape: f32[4,4,6,6], index: 1, kind: output, shape index: {}]
  %s2 = scalar_lea.hbm %s0, 96
  $region1: #{custom-call.1} parent=0
    #allocation0 [shape = 's32[1]{0}', space=sflag, size = 0x4, scoped, tag = 'scoped memory for custom-call.1']
    %3 = vsyncpa [#allocation0], 0
    %s5 = sshll.u32 %s2, 4
    %s6 = int_to_ptr.hbm [resolvable:$true] %s5
    %s7 = sshll.u32 %s1, 4
    %s8 = int_to_ptr.vmem [resolvable:$true] %s7
    %10 = dma.hbm_to_vmem [thread:$0]  %s6, 1536, %s8, [#allocation0]
    %12 = dma.done [#allocation0], 1536
    %13 = vsyncpa [#allocation0], 1

// kernel: spectral_conv2d.1
$region0: #{spectral_conv2d.1}
  #allocation0 [shape = 'u32[]', space=smem, size = 0x4, offset = 0x4, fixed_abs, tag = 'smem constant byte address 0x4 - core index']
  #allocation1 [shape = 'u32[72,128]{1,0:T(1,128)}', space=vmem, size = 0x9000, scoped, tag = 'internal scratch']
  %s0 = inlined_call_operand.vmem [shape: f32[2,8,128], index: 0, kind: input, shape index: {}]
  %s1 = inlined_call_operand.vmem [shape: f32[4,8,128], index: 1, kind: input, shape index: {}]
  %s2 = inlined_call_operand.vmem [shape: f32[2,8,128], index: 2, kind: output, shape index: {}]
  %s3 = sld [smem:[#allocation0]]
  $region18: #{spectral_conv2d.1} parent=0
    _
  %s5 = ssub.s32 1, %s3
  %s6 = scalar_select 0, %s5, %s3
  // Predicated region
  $region2: #{spectral_conv2d.1} parent=0 // pred_check
    _
  $region3: #{spectral_conv2d.1} parent=0 // pred_check_branch
    %8 = sbr.rel (0) target = $region5
  $region4: #{spectral_conv2d.1} parent=0 // pred_region
    _
  $region5: #{spectral_conv2d.1} parent=0 // pred_fallthru
    _
  // Predicated region
  $region6: #{spectral_conv2d.1} parent=0 // pred_check
    _
  $region7: #{spectral_conv2d.1} parent=0 // pred_check_branch
    %10 = sbr.rel (0) target = $region9
  $region8: #{spectral_conv2d.1} parent=0 // pred_region
    _
  $region9: #{spectral_conv2d.1} parent=0 // pred_fallthru
    _
  %v11 = vld [vmem:[%s0] sm:$0xff]
  %v12 = vld [vmem:[%s0 + $0x8] sm:$0xff]
  %v13 = vld [vmem:[%s1] sm:$0xff]
  %v14 = vld [vmem:[%s1 + $0x8] sm:$0xff]
  %v15 = vld [vmem:[%s1 + $0x10] sm:$0xff]
  %v16 = vld [vmem:[%s1 + $0x18] sm:$0xff]
  %v17 = vperm.slane %v11, 0
  %v18 = vperm.slane %v12, 0
  %v19 = vmul.f32 %v17, %v13
  %v20 = vmul.f32 %v18, %v13
  %v21 = vadd.f32 %v19, 0.0
  %v22 = vadd.f32 %v20, 0.0
  %v23 = vperm.slane %v11, 4
  %v24 = vperm.slane %v12, 4
  %v25 = vmul.f32 %v23, %v13
  %v26 = vmul.f32 %v24, %v13
  %v29 = vrot.slane %v25, 4
  %v30 = vrot.slane %v26, 4
  %v33 = vsub.f32 %v21, %v29
  %v34 = vsub.f32 %v22, %v30
  %v35 = vadd.f32 %v21, %v29
  %v36 = vadd.f32 %v22, %v30
  %v37 = vperm.slane %v11, 1
  %v38 = vperm.slane %v12, 1
  %v39 = vmul.f32 %v37, %v14
  %v40 = vmul.f32 %v38, %v14
  %v41 = vadd.f32 %v33, %v39
  %v42 = vadd.f32 %v34, %v40
  %v43 = vperm.slane %v11, 5
  %v44 = vperm.slane %v12, 5
  %v45 = vmul.f32 %v43, %v14
  %v46 = vmul.f32 %v44, %v14
  %v49 = vrot.slane %v45, 4
  %v50 = vrot.slane %v46, 4
  %v53 = vsub.f32 %v41, %v49
  %v54 = vsub.f32 %v42, %v50
  %v55 = vadd.f32 %v35, %v39
  %v56 = vadd.f32 %v36, %v40
  %v57 = vadd.f32 %v55, %v49
  %v58 = vadd.f32 %v56, %v50
  %v59 = vperm.slane %v11, 2
  %v60 = vperm.slane %v12, 2
  %v61 = vmul.f32 %v59, %v15
  %v62 = vmul.f32 %v60, %v15
  %v63 = vadd.f32 %v53, %v61
  %v64 = vadd.f32 %v54, %v62
  %v65 = vperm.slane %v11, 6
  %v66 = vperm.slane %v12, 6
  %v67 = vmul.f32 %v65, %v15
  %v68 = vmul.f32 %v66, %v15
  %v71 = vrot.slane %v67, 4
  %v72 = vrot.slane %v68, 4
  %v75 = vsub.f32 %v63, %v71
  %v76 = vsub.f32 %v64, %v72
  %v77 = vadd.f32 %v57, %v61
  %v78 = vadd.f32 %v58, %v62
  %v79 = vadd.f32 %v77, %v71
  %v80 = vadd.f32 %v78, %v72
  %v81 = vperm.slane %v11, 3
  %v82 = vperm.slane %v12, 3
  %v83 = vmul.f32 %v81, %v16
  %v84 = vmul.f32 %v82, %v16
  %v85 = vadd.f32 %v75, %v83
  %v86 = vadd.f32 %v76, %v84
  %v87 = vperm.slane %v11, 7
  %v88 = vperm.slane %v12, 7
  %v89 = vmul.f32 %v87, %v16
  %v90 = vmul.f32 %v88, %v16
  %v93 = vrot.slane %v89, 4
  %v94 = vrot.slane %v90, 4
  %v97 = vsub.f32 %v85, %v93
  %v98 = vsub.f32 %v86, %v94
  %v99 = vadd.f32 %v79, %v83
  %v100 = vadd.f32 %v80, %v84
  %v101 = vadd.f32 %v99, %v93
  %v102 = vadd.f32 %v100, %v94
  %vm103 = vcmask 1043456
  %v104 = vsel %vm103, %v97, %v101
  %v105 = vsel %vm103, %v98, %v102
  %106 = vst [vmem:[%s2] sm:$0xff] %v104
  %107 = vst [vmem:[%s2 + $0x8] sm:$0xff] %v105
  // Predicated region
  $region10: #{spectral_conv2d.1} parent=0 // pred_check
    _
  $region11: #{spectral_conv2d.1} parent=0 // pred_check_branch
    %109 = sbr.rel (0) target = $region13
  $region12: #{spectral_conv2d.1} parent=0 // pred_region
    _
  $region13: #{spectral_conv2d.1} parent=0 // pred_fallthru
    _
  // Predicated region
  $region14: #{spectral_conv2d.1} parent=0 // pred_check
    _
  $region15: #{spectral_conv2d.1} parent=0 // pred_check_branch
    %111 = sbr.rel (0) target = $region17
  $region16: #{spectral_conv2d.1} parent=0 // pred_region
    _
  $region17: #{spectral_conv2d.1} parent=0 // pred_fallthru
    _

// kernel: reverse.0
$region0: #{reverse.0}
  %s0 = inlined_call_operand.vmem [shape: f32[2,4,16,7], index: 0, kind: input, shape index: {}]
  %s1 = inlined_call_operand.vmem [shape: f32[2,4,16,7], index: 1, kind: output, shape index: {}]
  $region1: #{reverse.0} parent=0
    #allocation0 [shape = 'u8[65536]{0}', space=vmem, size = 0x10000, scoped, tag = 'operand span for operand 0']
    #allocation1 [shape = 'u8[32768]{0}', space=vmem, size = 0x8000, scoped, tag = 'operand span for operand 1']
    %s2 = scalar_lea.vmem [#allocation0], 8
    // Predicated region
    $region2: #{reverse.0} parent=1 // pred_check
      _
    $region3: #{reverse.0} parent=1 // pred_check_branch
      %4 = sbr.rel (0) target = $region5
    $region4: #{reverse.0} parent=1 // pred_region
      // Predicated region
      $region6: #{reverse.0} parent=4 // pred_check
        _
      $region7: #{reverse.0} parent=4 // pred_check_branch
        %6 = sbr.rel (0) target = $region9
      $region8: #{reverse.0} parent=4 // pred_region
        // Predicated region
        $region21: #{reverse.0} parent=8 // pred_check
          _
        $region22: #{reverse.0} parent=8 // pred_check_branch
          %36 = sbr.rel (0) target = $region24
        $region23: #{reverse.0} parent=8 // pred_region
          loop: start=0, step=1, limit=1
          $region25: #{reverse.0} parent=23 // loop_pre_header
            _
          $region26: #{reverse.0} parent=23 // loop_header
            %s38 = sphi 0, %s42
            %p39 = scmp.ge.s32.totalorder %s38, 1
            %s43 = sphi %s0, %s0
            %s44 = sphi %s2, %s2
          $region27: #{reverse.0} parent=23 // loop_header_branch
            %41 = sbr.rel (%p39) target = $region31
          $region28: #{reverse.0} parent=23 // loop_body
            %v45 = vld [vmem:[%s43] sm:$0xff]
            %46 = vst [vmem:[%s44] sm:$0xff] %v45
            %v47 = vld [vmem:[%s43 + $0x8] sm:$0xff]
            %48 = vst [vmem:[%s44 + $0x10] sm:$0xff] %v47
            %v49 = vld [vmem:[%s43 + $0x10] sm:$0xff]
            %50 = vst [vmem:[%s44 + $0x20] sm:$0xff] %v49
            %v51 = vld [vmem:[%s43 + $0x18] sm:$0xff]
            %52 = vst [vmem:[%s44 + $0x30] sm:$0xff] %v51
            %v53 = vld [vmem:[%s43 + $0x20] sm:$0xff]
            %54 = vst [vmem:[%s44 + $0x40] sm:$0xff] %v53
            %v55 = vld [vmem:[%s43 + $0x28] sm:$0xff]
            %56 = vst [vmem:[%s44 + $0x50] sm:$0xff] %v55
            %v57 = vld [vmem:[%s43 + $0x30] sm:$0xff]
            %58 = vst [vmem:[%s44 + $0x60] sm:$0xff] %v57
            %v59 = vld [vmem:[%s43 + $0x38] sm:$0xff]
            %60 = vst [vmem:[%s44 + $0x70] sm:$0xff] %v59
          $region29: #{reverse.0} parent=23 // loop_footer
            %s42 = sadd.s32 1, %s38
          $region30: #{reverse.0} parent=23 // loop_footer_branch
            %37 = sbr.rel target = $region26
          $region31: #{reverse.0} parent=23 // loop_exit
            _
        $region24: #{reverse.0} parent=8 // pred_fallthru
          _
        // Predicated region
        $region32: #{reverse.0} parent=8 // pred_check
          _
        $region33: #{reverse.0} parent=8 // pred_check_branch
          %62 = sbr.rel target = $region35
        $region34: #{reverse.0} parent=8 // pred_region
          _
        $region35: #{reverse.0} parent=8 // pred_fallthru
          _
      $region9: #{reverse.0} parent=4 // pred_fallthru
        _
      // Predicated region
      $region10: #{reverse.0} parent=4 // pred_check
        _
      $region11: #{reverse.0} parent=4 // pred_check_branch
        %8 = sbr.rel target = $region13
      $region12: #{reverse.0} parent=4 // pred_region
        %s10 = ssub.s32 256, 1
        loop: start=0, step=1, limit=1
        $region14: #{reverse.0} parent=12 // loop_pre_header
          _
        $region15: #{reverse.0} parent=12 // loop_header
          %s12 = sphi 0, %s16
          %p13 = scmp.ge.s32.totalorder %s12, 1
          %s17 = sphi %s0, %s0
          %s18 = sphi %s2, %s2
        $region16: #{reverse.0} parent=12 // loop_header_branch
          %15 = sbr.rel (%p13) target = $region20
        $region17: #{reverse.0} parent=12 // loop_body
          %v19 = vld [vmem:[%s17] sm:%s10]
          %20 = vst [vmem:[%s18] sm:%s10] %v19
          %v21 = vld [vmem:[%s17 + $0x8] sm:%s10]
          %22 = vst [vmem:[%s18 + $0x10] sm:%s10] %v21
          %v23 = vld [vmem:[%s17 + $0x10] sm:%s10]
          %24 = vst [vmem:[%s18 + $0x20] sm:%s10] %v23
          %v25 = vld [vmem:[%s17 + $0x18] sm:%s10]
          %26 = vst [vmem:[%s18 + $0x30] sm:%s10] %v25
          %v27 = vld [vmem:[%s17 + $0x20] sm:%s10]
          %28 = vst [vmem:[%s18 + $0x40] sm:%s10] %v27
          %v29 = vld [vmem:[%s17 + $0x28] sm:%s10]
          %30 = vst [vmem:[%s18 + $0x50] sm:%s10] %v29
          %v31 = vld [vmem:[%s17 + $0x30] sm:%s10]
          %32 = vst [vmem:[%s18 + $0x60] sm:%s10] %v31
          %v33 = vld [vmem:[%s17 + $0x38] sm:%s10]
          %34 = vst [vmem:[%s18 + $0x70] sm:%s10] %v33
        $region18: #{reverse.0} parent=12 // loop_footer
          %s16 = sadd.s32 1, %s12
        $region19: #{reverse.0} parent=12 // loop_footer_branch
          %11 = sbr.rel target = $region15
        $region20: #{reverse.0} parent=12 // loop_exit
          _
      $region13: #{reverse.0} parent=4 // pred_fallthru
        _
    $region5: #{reverse.0} parent=1 // pred_fallthru
      _
    %63 = vnop
    %s64 = scalar_lea.vmem [#allocation0], 7
    %v65 = vld [vmem:[%s64] ss:$-1 sm:$0xff]
    %v66 = vrot.slane %v65, 1
    %67 = vst [vmem:[#allocation1] sm:$0xff] %v66
    %s68 = scalar_lea.vmem [#allocation0], 8
    %s69 = scalar_lea.vmem %s68, 7 [#allocation0]
    %v70 = vld [vmem:[%s69] ss:$-1 sm:$0xff]
    %v71 = vrot.slane %v70, 1
    %v72 = vlaneseq
    %v73 = vshrl.u32 %v72, 7
    %vm74 = vcmp.lt.s32.totalorder %v73, 7
    %75 = vst.msk [vmem:[#allocation1] sm:$0xff] %vm74, %v71
    %s76 = scalar_lea.vmem [#allocation1], 8
    %s77 = scalar_lea.vmem [#allocation0], 16
    %s78 = scalar_lea.vmem %s77, 7 [#allocation0]
    %v79 = vld [vmem:[%s78] ss:$-1 sm:$0xff]
    %v80 = vrot.slane %v79, 1
    %81 = vst [vmem:[%s76] sm:$0xff] %v80
    %s82 = scalar_lea.vmem %s77, 8 [#allocation0]
    %s83 = scalar_lea.vmem %s82, 7 [#allocation0]
    %v84 = vld [vmem:[%s83] ss:$-1 sm:$0xff]
    %v85 = vrot.slane %v84, 1
    %v86 = vlaneseq
    %v87 = vshrl.u32 %v86, 7
    %vm88 = vcmp.lt.s32.totalorder %v87, 7
    %89 = vst.msk [vmem:[%s76] sm:$0xff] %vm88, %v85
    %s90 = scalar_lea.vmem [#allocation1], 16
    %s91 = scalar_lea.vmem [#allocation0], 32
    %s92 = scalar_lea.vmem %s91, 7 [#allocation0]
    %v93 = vld [vmem:[%s92] ss:$-1 sm:$0xff]
    %v94 = vrot.slane %v93, 1
    %95 = vst [vmem:[%s90] sm:$0xff] %v94
    %s96 = scalar_lea.vmem %s91, 8 [#allocation0]
    %s97 = scalar_lea.vmem %s96, 7 [#allocation0]
    %v98 = vld [vmem:[%s97] ss:$-1 sm:$0xff]
    %v99 = vrot.slane %v98, 1
    %v100 = vlaneseq
    %v101 = vshrl.u32 %v100, 7
    %vm102 = vcmp.lt.s32.totalorder %v101, 7
    %103 = vst.msk [vmem:[%s90] sm:$0xff] %vm102, %v99
    %s104 = scalar_lea.vmem [#allocation1], 24
    %s105 = scalar_lea.vmem [#allocation0], 48
    %s106 = scalar_lea.vmem %s105, 7 [#allocation0]
    %v107 = vld [vmem:[%s106] ss:$-1 sm:$0xff]
    %v108 = vrot.slane %v107, 1
    %109 = vst [vmem:[%s104] sm:$0xff] %v108
    %s110 = scalar_lea.vmem %s105, 8 [#allocation0]
    %s111 = scalar_lea.vmem %s110, 7 [#allocation0]
    %v112 = vld [vmem:[%s111] ss:$-1 sm:$0xff]
    %v113 = vrot.slane %v112, 1
    %v114 = vlaneseq
    %v115 = vshrl.u32 %v114, 7
    %vm116 = vcmp.lt.s32.totalorder %v115, 7
    %117 = vst.msk [vmem:[%s104] sm:$0xff] %vm116, %v113
    %s118 = scalar_lea.vmem [#allocation1], 32
    %s119 = scalar_lea.vmem [#allocation0], 64
    %s120 = scalar_lea.vmem %s119, 7 [#allocation0]
    %v121 = vld [vmem:[%s120] ss:$-1 sm:$0xff]
    %v122 = vrot.slane %v121, 1
    %123 = vst [vmem:[%s118] sm:$0xff] %v122
    %s124 = scalar_lea.vmem %s119, 8 [#allocation0]
    %s125 = scalar_lea.vmem %s124, 7 [#allocation0]
    %v126 = vld [vmem:[%s125] ss:$-1 sm:$0xff]
    %v127 = vrot.slane %v126, 1
    %v128 = vlaneseq
    %v129 = vshrl.u32 %v128, 7
    %vm130 = vcmp.lt.s32.totalorder %v129, 7
    %131 = vst.msk [vmem:[%s118] sm:$0xff] %vm130, %v127
    %s132 = scalar_lea.vmem [#allocation1], 40
    %s133 = scalar_lea.vmem [#allocation0], 80
    %s134 = scalar_lea.vmem %s133, 7 [#allocation0]
    %v135 = vld [vmem:[%s134] ss:$-1 sm:$0xff]
    %v136 = vrot.slane %v135, 1
    %137 = vst [vmem:[%s132] sm:$0xff] %v136
    %s138 = scalar_lea.vmem %s133, 8 [#allocation0]
    %s139 = scalar_lea.vmem %s138, 7 [#allocation0]
    %v140 = vld [vmem:[%s139] ss:$-1 sm:$0xff]
    %v141 = vrot.slane %v140, 1
    %v142 = vlaneseq
    %v143 = vshrl.u32 %v142, 7
    %vm144 = vcmp.lt.s32.totalorder %v143, 7
    %145 = vst.msk [vmem:[%s132] sm:$0xff] %vm144, %v141
    %s146 = scalar_lea.vmem [#allocation1], 48
    %s147 = scalar_lea.vmem [#allocation0], 96
    %s148 = scalar_lea.vmem %s147, 7 [#allocation0]
    %v149 = vld [vmem:[%s148] ss:$-1 sm:$0xff]
    %v150 = vrot.slane %v149, 1
    %151 = vst [vmem:[%s146] sm:$0xff] %v150
    %s152 = scalar_lea.vmem %s147, 8 [#allocation0]
    %s153 = scalar_lea.vmem %s152, 7 [#allocation0]
    %v154 = vld [vmem:[%s153] ss:$-1 sm:$0xff]
    %v155 = vrot.slane %v154, 1
    %v156 = vlaneseq
    %v157 = vshrl.u32 %v156, 7
    %vm158 = vcmp.lt.s32.totalorder %v157, 7
    %159 = vst.msk [vmem:[%s146] sm:$0xff] %vm158, %v155
    %s160 = scalar_lea.vmem [#allocation1], 56
    %s161 = scalar_lea.vmem [#allocation0], 112
    %s162 = scalar_lea.vmem %s161, 7 [#allocation0]
    %v163 = vld [vmem:[%s162] ss:$-1 sm:$0xff]
    %v164 = vrot.slane %v163, 1
    %165 = vst [vmem:[%s160] sm:$0xff] %v164
    %s166 = scalar_lea.vmem %s161, 8 [#allocation0]
    %s167 = scalar_lea.vmem %s166, 7 [#allocation0]
    %v168 = vld [vmem:[%s167] ss:$-1 sm:$0xff]
    %v169 = vrot.slane %v168, 1
    %v170 = vlaneseq
    %v171 = vshrl.u32 %v170, 7
    %vm172 = vcmp.lt.s32.totalorder %v171, 7
    %173 = vst.msk [vmem:[%s160] sm:$0xff] %vm172, %v169
    // Predicated region
    $region36: #{reverse.0} parent=1 // pred_check
      _
    $region37: #{reverse.0} parent=1 // pred_check_branch
      %175 = sbr.rel (0) target = $region39
    $region38: #{reverse.0} parent=1 // pred_region
      // Predicated region
      $region40: #{reverse.0} parent=38 // pred_check
        _
      $region41: #{reverse.0} parent=38 // pred_check_branch
        %177 = sbr.rel (0) target = $region43
      $region42: #{reverse.0} parent=38 // pred_region
        // Predicated region
        $region55: #{reverse.0} parent=42 // pred_check
          _
        $region56: #{reverse.0} parent=42 // pred_check_branch
          %207 = sbr.rel (0) target = $region58
        $region57: #{reverse.0} parent=42 // pred_region
          loop: start=0, step=1, limit=1
          $region59: #{reverse.0} parent=57 // loop_pre_header
            _
          $region60: #{reverse.0} parent=57 // loop_header
            %s209 = sphi 0, %s213
            %p210 = scmp.ge.s32.totalorder %s209, 1
            %s214 = sphi [#allocation1], [#allocation1]
            %s215 = sphi %s1, %s1
          $region61: #{reverse.0} parent=57 // loop_header_branch
            %212 = sbr.rel (%p210) target = $region65
          $region62: #{reverse.0} parent=57 // loop_body
            %v216 = vld [vmem:[%s214] sm:$0xff]
            %217 = vst [vmem:[%s215] sm:$0xff] %v216
            %v218 = vld [vmem:[%s214 + $0x8] sm:$0xff]
            %219 = vst [vmem:[%s215 + $0x8] sm:$0xff] %v218
            %v220 = vld [vmem:[%s214 + $0x10] sm:$0xff]
            %221 = vst [vmem:[%s215 + $0x10] sm:$0xff] %v220
            %v222 = vld [vmem:[%s214 + $0x18] sm:$0xff]
            %223 = vst [vmem:[%s215 + $0x18] sm:$0xff] %v222
            %v224 = vld [vmem:[%s214 + $0x20] sm:$0xff]
            %225 = vst [vmem:[%s215 + $0x20] sm:$0xff] %v224
            %v226 = vld [vmem:[%s214 + $0x28] sm:$0xff]
            %227 = vst [vmem:[%s215 + $0x28] sm:$0xff] %v226
            %v228 = vld [vmem:[%s214 + $0x30] sm:$0xff]
            %229 = vst [vmem:[%s215 + $0x30] sm:$0xff] %v228
            %v230 = vld [vmem:[%s214 + $0x38] sm:$0xff]
            %231 = vst [vmem:[%s215 + $0x38] sm:$0xff] %v230
          $region63: #{reverse.0} parent=57 // loop_footer
            %s213 = sadd.s32 1, %s209
          $region64: #{reverse.0} parent=57 // loop_footer_branch
            %208 = sbr.rel target = $region60
          $region65: #{reverse.0} parent=57 // loop_exit
            _
        $region58: #{reverse.0} parent=42 // pred_fallthru
          _
        // Predicated region
        $region66: #{reverse.0} parent=42 // pred_check
          _
        $region67: #{reverse.0} parent=42 // pred_check_branch
          %233 = sbr.rel target = $region69
        $region68: #{reverse.0} parent=42 // pred_region
          _
        $region69: #{reverse.0} parent=42 // pred_fallthru
          _
      $region43: #{reverse.0} parent=38 // pred_fallthru
        _
      // Predicated region
      $region44: #{reverse.0} parent=38 // pred_check
        _
      $region45: #{reverse.0} parent=38 // pred_check_branch
        %179 = sbr.rel target = $region47
      $region46: #{reverse.0} parent=38 // pred_region
        %s181 = ssub.s32 256, 1
        loop: start=0, step=1, limit=1
        $region48: #{reverse.0} parent=46 // loop_pre_header
          _
        $region49: #{reverse.0} parent=46 // loop_header
          %s183 = sphi 0, %s187
          %p184 = scmp.ge.s32.totalorder %s183, 1
          %s188 = sphi [#allocation1], [#allocation1]
          %s189 = sphi %s1, %s1
        $region50: #{reverse.0} parent=46 // loop_header_branch
          %186 = sbr.rel (%p184) target = $region54
        $region51: #{reverse.0} parent=46 // loop_body
          %v190 = vld [vmem:[%s188] sm:%s181]
          %191 = vst [vmem:[%s189] sm:%s181] %v190
          %v192 = vld [vmem:[%s188 + $0x8] sm:%s181]
          %193 = vst [vmem:[%s189 + $0x8] sm:%s181] %v192
          %v194 = vld [vmem:[%s188 + $0x10] sm:%s181]
          %195 = vst [vmem:[%s189 + $0x10] sm:%s181] %v194
          %v196 = vld [vmem:[%s188 + $0x18] sm:%s181]
          %197 = vst [vmem:[%s189 + $0x18] sm:%s181] %v196
          %v198 = vld [vmem:[%s188 + $0x20] sm:%s181]
          %199 = vst [vmem:[%s189 + $0x20] sm:%s181] %v198
          %v200 = vld [vmem:[%s188 + $0x28] sm:%s181]
          %201 = vst [vmem:[%s189 + $0x28] sm:%s181] %v200
          %v202 = vld [vmem:[%s188 + $0x30] sm:%s181]
          %203 = vst [vmem:[%s189 + $0x30] sm:%s181] %v202
          %v204 = vld [vmem:[%s188 + $0x38] sm:%s181]
          %205 = vst [vmem:[%s189 + $0x38] sm:%s181] %v204
        $region52: #{reverse.0} parent=46 // loop_footer
          %s187 = sadd.s32 1, %s183
        $region53: #{reverse.0} parent=46 // loop_footer_branch
          %182 = sbr.rel target = $region49
        $region54: #{reverse.0} parent=46 // loop_exit
          _
      $region47: #{reverse.0} parent=38 // pred_fallthru
        _
    $region39: #{reverse.0} parent=1 // pred_fallthru
      _
    %234 = vnop

</llo_original>
